<compile_context>
chip_gen: v6e
topology: v6e:2x2x1
jax: 0.10.0
libtpu: 0.0.40
codegen_flags: <defaults>
</compile_context>

<pallas_src>
import functools

import jax
import jax.numpy as jnp
from jax.experimental import pallas as pl
from jax.experimental.pallas import tpu as pltpu


_VMEM_TILE_BUDGET = 32 * 1024 * 1024   # budget for tiles + logits intermediates
_VMEM_LIMIT_BYTES = 48 * 1024 * 1024   # below v7x's 64 MiB physical VMEM


def _round_up(x, m):
    return (x + m - 1) // m * m


def _vmem_estimate(block_q, block_k, d):
    # 2x double-buffered q/k input tiles + ~2 live f32 (block_q, block_k)
    # logits-sized intermediates + accumulators / output (all f32 = 4 bytes).
    return 4 * (2 * (block_q + block_k) * d + 2 * block_q * block_k + 8 * block_q)


def _choose_tiles(b, d):
    """Pick (block_q, block_k) with block_k a multiple of block_q."""
    if b < 1024:
        # Small batch: a single block over the (8-padded) batch; 1x1 grid.
        blk = _round_up(b, 8)
        return blk, blk
    block_q = 512
    while block_q > 128 and _vmem_estimate(block_q, block_q, d) > _VMEM_TILE_BUDGET:
        block_q //= 2            # very large D: shrink (we never tile D)
    b_pad = _round_up(b, block_q)
    block_k = block_q
    # Prefer large key tiles (fewer grid steps, fewer key HBM re-reads);
    # 512/1024/1536/2048 are all multiples of 256 -> full 2x256^2 MXU tiles.
    for mult in (2, 3, 4):
        cand = block_q * mult
        if b_pad % cand == 0 and _vmem_estimate(block_q, cand, d) <= _VMEM_TILE_BUDGET:
            block_k = cand
    return block_q, block_k


def _contrastive_loss_kernel(q_ref, k_ref, o_ref, m_sc, l_sc, d_sc, *,
                             inv_temp, b_valid, b_pad, block_q, block_k):
    qi = pl.program_id(0)          # query-block index  ("parallel")
    ki = pl.program_id(1)          # key-block reduction ("arbitrary", last)

    @pl.when(ki == 0)
    def _():
        m_sc[...] = jnp.full_like(m_sc, -jnp.inf)
        l_sc[...] = jnp.zeros_like(l_sc)
        d_sc[...] = jnp.zeros_like(d_sc)

    q = q_ref[...]
    k = k_ref[...]

    # Fold 1/T into the (block_q, D) query tile once, in f32 (cheaper than
    # scaling the (block_q, block_k) logits tile every step).
    q_scaled = q.astype(jnp.float32) * inv_temp

    # (block_q, block_k) scaled-logits tile.  Contract on the last dim of both
    # operands so no k.T relayout is materialized.  Default precision: f32
    # inputs take the fast 1-pass bf16 MXU path, bf16 inputs the native path.
    s = jax.lax.dot_general(
        q_scaled.astype(q.dtype), k,
        dimension_numbers=(((1,), (1,)), ((), ())),
        preferred_element_type=jnp.float32)

    if b_valid < b_pad:
        # Zero-padded key columns must not contribute to the logsumexp.
        col = ki * block_k + jax.lax.broadcasted_iota(jnp.int32, s.shape, 1)
        s = jnp.where(col < b_valid, s, -1e30)

    # Diagonal logits <q_i, k_i>/T for this query block live in key block
    # ki == qi // ratio at sublane offset (qi % ratio) * block_q; grab them
    # with an f32 VPU row-dot on a slice of the key tile (no O(block^2)
    # iota/mask reduction, and independent of the bf16 matmul precision).
    ratio = block_k // block_q
    diag_ki = qi // ratio if ratio > 1 else qi

    @pl.when(ki == diag_ki)
    def _():
        if ratio > 1:
            off = pl.multiple_of((qi % ratio) * block_q, block_q)
            k_diag = k_ref[pl.ds(off, block_q), :]
        else:
            k_diag = k
        d_sc[...] = jnp.sum(q_scaled * k_diag.astype(jnp.float32),
                            axis=-1, keepdims=True)

    # Online logsumexp: running row-max + rescaled running sum of exps.
    m_prev = m_sc[...]
    m_new = jnp.maximum(m_prev, jnp.max(s, axis=-1, keepdims=True))
    alpha = jnp.exp(m_prev - m_new)
    l_sc[...] = alpha * l_sc[...] + jnp.sum(jnp.exp(s - m_new), axis=-1,
                                            keepdims=True)
    m_sc[...] = m_new

    @pl.when(ki == pl.num_programs(1) - 1)
    def _():
        # Per-row loss: logsumexp_j(s_ij) - s_ii.  The (block_q, 1) store is
        # lane-sparse, but total output traffic is only B*4 bytes written once
        # per query block, so the masked-store penalty is negligible.
        o_ref[...] = m_sc[...] + jnp.log(l_sc[...]) - d_sc[...]


def contrastive_loss(queries, keys, temperature=0.1, block_q=None, block_k=None):
    """queries, keys: (B, D). Returns the scalar mean InfoNCE loss (f32)."""
    b, d = queries.shape
    assert keys.shape == (b, d)

    if block_q is None or block_k is None:
        block_q, block_k = _choose_tiles(b, d)
    assert block_q % 8 == 0 and block_k % block_q == 0, (block_q, block_k)

    # Pad the batch so it tiles evenly; padded key columns are masked in the
    # kernel and padded query rows are dropped from the mean below.
    b_pad = _round_up(b, block_k)
    if b_pad != b:
        pad = ((0, b_pad - b), (0, 0))
        queries = jnp.pad(queries, pad)
        keys = jnp.pad(keys, pad)

    nb_q = b_pad // block_q
    nb_k = b_pad // block_k

    kernel = functools.partial(
        _contrastive_loss_kernel,
        inv_temp=float(1.0 / temperature),
        b_valid=b, b_pad=b_pad, block_q=block_q, block_k=block_k)

    per_row_loss = pl.pallas_call(
        kernel,
        out_shape=jax.ShapeDtypeStruct((b_pad, 1), jnp.float32),
        grid_spec=pltpu.PrefetchScalarGridSpec(
            num_scalar_prefetch=0,
            grid=(nb_q, nb_k),                 # key reduction on the last axis
            in_specs=[
                pl.BlockSpec((block_q, d), lambda qi, ki: (qi, 0)),   # queries
                pl.BlockSpec((block_k, d), lambda qi, ki: (ki, 0)),   # keys
            ],
            out_specs=pl.BlockSpec((block_q, 1), lambda qi, ki: (qi, 0)),
            scratch_shapes=[
                pltpu.VMEM((block_q, 1), jnp.float32),   # running max  m_i
                pltpu.VMEM((block_q, 1), jnp.float32),   # running sum  l_i
                pltpu.VMEM((block_q, 1), jnp.float32),   # diagonal logit
            ],
        ),
        compiler_params=pltpu.CompilerParams(
            dimension_semantics=("parallel", "arbitrary"),
            vmem_limit_bytes=_VMEM_LIMIT_BYTES,
        ),
    )(queries, keys)

    # Mean reduction (F.cross_entropy default), ignoring padded rows.
    return jnp.sum(per_row_loss[:b, 0]) / b


def _reference_loss(queries, keys, temperature=0.1):
    q = queries.astype(jnp.float32)
    k = keys.astype(jnp.float32)
    logits = jnp.matmul(q, k.T, precision=jax.lax.Precision.HIGHEST)
    logits = logits - jnp.max(logits, axis=-1, keepdims=True)
    logits = logits / temperature
    lse = jax.scipy.special.logsumexp(logits, axis=-1)
    b = logits.shape[0]
    diag = logits[jnp.arange(b), jnp.arange(b)]
    return jnp.mean(lse - diag)


if __name__ == "__main__":
    key = jax.random.PRNGKey(0)
    kq, kk = jax.random.split(key)

    def check(b, d, **kw):
        q = jax.random.normal(kq, (b, d), dtype=jnp.float32)
        k = jax.random.normal(kk, (b, d), dtype=jnp.float32)
        loss = jax.block_until_ready(contrastive_loss(q, k, temperature=0.1, **kw))
        ref = jax.block_until_ready(_reference_loss(q, k, temperature=0.1))
        # Kernel uses the fast 1-pass bf16 MXU path for logits (diag stays f32),
        # so compare against the f32 reference with a correspondingly looser tol.
        assert jnp.allclose(loss, ref, rtol=5e-2, atol=1e-1), (b, d, loss, ref)

    # Small demo shape consistent with the module (batch=8, hidden=32).
    check(8, 32)
    # Default heuristic: small batch, single block, 8 padded rows masked out.
    check(1000, 64)
    # Default heuristic: tiled path (block_q=512, block_k=2048), 4 parallel
    # query blocks, keys effectively VMEM-resident.
    check(2048, 128)
    # Explicit small tiles: exercises the multi-step online logsumexp
    # (3 key blocks), the off-diagonal key-slice path, and batch padding.
    check(1400, 128, block_q=256, block_k=512)

    print("KERNEL_OK")
</pallas_src>

<mosaic_0001>
module attributes {stable_mosaic.version = 11 : i64} {
  func.func @_contrastive_loss_kernel(%arg0: i32, %arg1: i32, %arg2: memref<8x32xf32, #tpu.memory_space<vmem>>, %arg3: memref<8x32xf32, #tpu.memory_space<vmem>>, %arg4: memref<8x1xf32, #tpu.memory_space<vmem>>, %arg5: memref<8x1xf32, #tpu.memory_space<vmem>>, %arg6: memref<8x1xf32, #tpu.memory_space<vmem>>, %arg7: memref<8x1xf32, #tpu.memory_space<vmem>>) attributes {dimension_semantics = [#tpu.dimension_semantics<parallel>, #tpu.dimension_semantics<arbitrary>], iteration_bounds = array<i64: 1, 1>, scalar_prefetch = 0 : i64, scratch_operands = 3 : i64, tpu.core_type = #tpu.core_type<tc>, window_params = [{transform_indices = @transform_0, window_bounds = array<i64: 8, 32>}, {transform_indices = @transform_1, window_bounds = array<i64: 8, 32>}, {transform_indices = @transform_2, window_bounds = array<i64: 8, 1>}]} {
    %c0_i32 = arith.constant 0 : i32
    %0 = arith.cmpi eq, %arg1, %c0_i32 : i32
    %1 = arith.extui %0 : i1 to i32
    %c0_i32_0 = arith.constant 0 : i32
    %2 = arith.cmpi ne, %1, %c0_i32_0 : i32
    scf.if %2 {
      %cst_18 = arith.constant 0xFF800000 : f32
      %30 = vector.broadcast %cst_18 : f32 to vector<8x1xf32>
      %c0_19 = arith.constant 0 : index
      %c0_20 = arith.constant 0 : index
      %31 = vector.load %arg5[%c0_19, %c0_20] : memref<8x1xf32, #tpu.memory_space<vmem>>, vector<8x1xf32>
      tpu.vector_store %arg5[%c0_19, %c0_20], %30 {strides = array<i32>} : memref<8x1xf32, #tpu.memory_space<vmem>>, vector<8x1xf32>,
      %cst_21 = arith.constant 0.000000e+00 : f32
      %32 = vector.broadcast %cst_21 : f32 to vector<8x1xf32>
      %c0_22 = arith.constant 0 : index
      %c0_23 = arith.constant 0 : index
      %33 = vector.load %arg6[%c0_22, %c0_23] : memref<8x1xf32, #tpu.memory_space<vmem>>, vector<8x1xf32>
      tpu.vector_store %arg6[%c0_22, %c0_23], %32 {strides = array<i32>} : memref<8x1xf32, #tpu.memory_space<vmem>>, vector<8x1xf32>,
      %cst_24 = arith.constant 0.000000e+00 : f32
      %34 = vector.broadcast %cst_24 : f32 to vector<8x1xf32>
      %c0_25 = arith.constant 0 : index
      %c0_26 = arith.constant 0 : index
      %35 = vector.load %arg7[%c0_25, %c0_26] : memref<8x1xf32, #tpu.memory_space<vmem>>, vector<8x1xf32>
      tpu.vector_store %arg7[%c0_25, %c0_26], %34 {strides = array<i32>} : memref<8x1xf32, #tpu.memory_space<vmem>>, vector<8x1xf32>,
    } else {
    }
    %c0 = arith.constant 0 : index
    %c0_1 = arith.constant 0 : index
    %3 = vector.load %arg2[%c0, %c0_1] : memref<8x32xf32, #tpu.memory_space<vmem>>, vector<8x32xf32>
    %c0_2 = arith.constant 0 : index
    %c0_3 = arith.constant 0 : index
    %4 = vector.load %arg3[%c0_2, %c0_3] : memref<8x32xf32, #tpu.memory_space<vmem>>, vector<8x32xf32>
    %cst = arith.constant 1.000000e+01 : f32
    %5 = vector.broadcast %cst : f32 to vector<8x32xf32>
    %6 = arith.mulf %3, %5 : vector<8x32xf32>
    %cst_4 = arith.constant dense<0.000000e+00> : vector<8x8xf32>
    %7 = tpu.matmul %6, %4, %cst_4 {dimension_numbers = #tpu.dot_dimension_numbers<[1], [1], [0], [0], [0, 0, 1, 0], [], []>} : vector<8x32xf32>, vector<8x32xf32>, vector<8x8xf32> -> vector<8x8xf32>
    %8 = arith.cmpi eq, %arg1, %arg0 : i32
    %9 = arith.extui %8 : i1 to i32
    %c0_i32_5 = arith.constant 0 : i32
    %10 = arith.cmpi ne, %9, %c0_i32_5 : i32
    scf.if %10 {
      %30 = arith.mulf %6, %4 : vector<8x32xf32>
      %cst_18 = arith.constant dense<0.000000e+00> : vector<8xf32>
      %31 = vector.multi_reduction <add>, %30, %cst_18 [1] : vector<8x32xf32> to vector<8xf32>
      %32 = vector.shape_cast %31 : vector<8xf32> to vector<8x1xf32>
      %c0_19 = arith.constant 0 : index
      %c0_20 = arith.constant 0 : index
      %33 = vector.load %arg7[%c0_19, %c0_20] : memref<8x1xf32, #tpu.memory_space<vmem>>, vector<8x1xf32>
      tpu.vector_store %arg7[%c0_19, %c0_20], %32 {strides = array<i32>} : memref<8x1xf32, #tpu.memory_space<vmem>>, vector<8x1xf32>,
    } else {
    }
    %c0_6 = arith.constant 0 : index
    %c0_7 = arith.constant 0 : index
    %11 = vector.load %arg5[%c0_6, %c0_7] : memref<8x1xf32, #tpu.memory_space<vmem>>, vector<8x1xf32>
    %cst_8 = arith.constant dense<0xFF800000> : vector<8xf32>
    %12 = vector.multi_reduction <maximumf>, %7, %cst_8 [1] : vector<8x8xf32> to vector<8xf32>
    %13 = vector.shape_cast %12 : vector<8xf32> to vector<8x1xf32>
    %14 = arith.maximumf %11, %13 : vector<8x1xf32>
    %15 = arith.subf %11, %14 : vector<8x1xf32>
    %16 = math.exp %15 : vector<8x1xf32>
    %c0_9 = arith.constant 0 : index
    %c0_10 = arith.constant 0 : index
    %17 = vector.load %arg6[%c0_9, %c0_10] : memref<8x1xf32, #tpu.memory_space<vmem>>, vector<8x1xf32>
    %18 = arith.mulf %16, %17 : vector<8x1xf32>
    %19 = vector.broadcast %14 : vector<8x1xf32> to vector<8x8xf32>
    %20 = arith.subf %7, %19 : vector<8x8xf32>
    %21 = math.exp %20 : vector<8x8xf32>
    %cst_11 = arith.constant dense<0.000000e+00> : vector<8xf32>
    %22 = vector.multi_reduction <add>, %21, %cst_11 [1] : vector<8x8xf32> to vector<8xf32>
    %23 = vector.shape_cast %22 : vector<8xf32> to vector<8x1xf32>
    %24 = arith.addf %18, %23 : vector<8x1xf32>
    %c0_12 = arith.constant 0 : index
    %c0_13 = arith.constant 0 : index
    %25 = vector.load %arg6[%c0_12, %c0_13] : memref<8x1xf32, #tpu.memory_space<vmem>>, vector<8x1xf32>
    tpu.vector_store %arg6[%c0_12, %c0_13], %24 {strides = array<i32>} : memref<8x1xf32, #tpu.memory_space<vmem>>, vector<8x1xf32>,
    %c0_14 = arith.constant 0 : index
    %c0_15 = arith.constant 0 : index
    %26 = vector.load %arg5[%c0_14, %c0_15] : memref<8x1xf32, #tpu.memory_space<vmem>>, vector<8x1xf32>
    tpu.vector_store %arg5[%c0_14, %c0_15], %14 {strides = array<i32>} : memref<8x1xf32, #tpu.memory_space<vmem>>, vector<8x1xf32>,
    %c0_i32_16 = arith.constant 0 : i32
    %27 = arith.cmpi eq, %arg1, %c0_i32_16 : i32
    %28 = arith.extui %27 : i1 to i32
    %c0_i32_17 = arith.constant 0 : i32
    %29 = arith.cmpi ne, %28, %c0_i32_17 : i32
    scf.if %29 {
      %c0_18 = arith.constant 0 : index
      %c0_19 = arith.constant 0 : index
      %30 = vector.load %arg5[%c0_18, %c0_19] : memref<8x1xf32, #tpu.memory_space<vmem>>, vector<8x1xf32>
      %c0_20 = arith.constant 0 : index
      %c0_21 = arith.constant 0 : index
      %31 = vector.load %arg6[%c0_20, %c0_21] : memref<8x1xf32, #tpu.memory_space<vmem>>, vector<8x1xf32>
      %32 = math.log %31 : vector<8x1xf32>
      %33 = arith.addf %30, %32 : vector<8x1xf32>
      %c0_22 = arith.constant 0 : index
      %c0_23 = arith.constant 0 : index
      %34 = vector.load %arg7[%c0_22, %c0_23] : memref<8x1xf32, #tpu.memory_space<vmem>>, vector<8x1xf32>
      %35 = arith.subf %33, %34 : vector<8x1xf32>
      %c0_24 = arith.constant 0 : index
      %c0_25 = arith.constant 0 : index
      %36 = vector.load %arg4[%c0_24, %c0_25] : memref<8x1xf32, #tpu.memory_space<vmem>>, vector<8x1xf32>
      tpu.vector_store %arg4[%c0_24, %c0_25], %35 {strides = array<i32>} : memref<8x1xf32, #tpu.memory_space<vmem>>, vector<8x1xf32>,
    } else {
    }
    return
  }
  func.func @transform_0(%arg0: i32, %arg1: i32) -> (i32, i32) {
    %c0_i32 = arith.constant 0 : i32
    %c0_i32_0 = arith.constant 0 : i32
    return %arg0, %c0_i32 : i32, i32
  }
  func.func @transform_1(%arg0: i32, %arg1: i32) -> (i32, i32) {
    %c0_i32 = arith.constant 0 : i32
    %c0_i32_0 = arith.constant 0 : i32
    return %arg1, %c0_i32 : i32, i32
  }
  func.func @transform_2(%arg0: i32, %arg1: i32) -> (i32, i32) {
    %c0_i32 = arith.constant 0 : i32
    %c0_i32_0 = arith.constant 0 : i32
    return %arg0, %c0_i32 : i32, i32
  }
}

</mosaic_0001>

<llo_original>
// kernel: tpu_custom_call.1
$region0: #{tpu_custom_call.1}
  #allocation0 [shape = 'u32[]', space=smem, size = 0x4, offset = 0x4, fixed_abs, tag = 'smem constant byte address 0x4 - core index']
  #allocation1 [shape = 'u32[144,128]{1,0:T(1,128)}', space=vmem, size = 0x12000, scoped, tag = 'internal scratch']
  #allocation2 [shape = 'f32[8,1]{1,0:T(8,128)}', space=vmem, size = 0x1000, scoped, tag = 'scratch operand']
  #allocation3 [shape = 'f32[8,1]{1,0:T(8,128)}', space=vmem, size = 0x1000, scoped, tag = 'scratch operand']
  #allocation4 [shape = 'f32[8,1]{1,0:T(8,128)}', space=vmem, size = 0x1000, scoped, tag = 'scratch operand']
  %s0 = inlined_call_operand.hbm [shape: f32[8,32], index: 0, kind: input, shape index: {}]
  %s1 = inlined_call_operand.hbm [shape: f32[8,32], index: 1, kind: input, shape index: {}]
  %s2 = inlined_call_operand.vmem [shape: f32[8,1], index: 2, kind: output, shape index: {}]
  %s3 = sld [smem:[#allocation0]]
  $region38: #{tpu_custom_call.1} parent=0
    _
  %s5 = ssub.s32 1, %s3
  %s6 = scalar_select 0, %s5, %s3
  $region1: #{tpu_custom_call.1} parent=0
    #allocation5 [shape = 'u8[4096]{0}', space=vmem, size = 0x1000, scoped, tag = 'input window, operand 0, single buffered']
    #allocation6 [shape = 's32[1]{0}', space=sflag, size = 0x4, scoped, tag = 'scoped memory for tpu_custom_call.1']
    #allocation7 [shape = 'u8[4096]{0}', space=vmem, size = 0x1000, scoped, tag = 'input window, operand 1, single buffered']
    #allocation8 [shape = 's32[1]{0}', space=sflag, size = 0x4, scoped, tag = 'scoped memory for tpu_custom_call.1']
    %7 = vsyncpa [#allocation6], 0
    %8 = vsyncpa [#allocation8], 0
    // Predicated region
    $region2: #{tpu_custom_call.1} parent=1 // pred_check
      _
    $region3: #{tpu_custom_call.1} parent=1 // pred_check_branch
      %10 = sbr.rel (0) target = $region5
    $region4: #{tpu_custom_call.1} parent=1 // pred_region
      %s12 = ssub.s32 128, 128
      %13 = vsyncadd [#allocation6], %s12
      %s15 = sshll.u32 [#allocation5], 4
      %s16 = int_to_ptr.vmem [resolvable:$true] %s15
      %18 = dma.hbm_to_vmem [thread:$0]  %s0, 128, %s16, [#allocation6]
    $region5: #{tpu_custom_call.1} parent=1 // pred_fallthru
      _
    // Predicated region
    $region6: #{tpu_custom_call.1} parent=1 // pred_check
      _
    $region7: #{tpu_custom_call.1} parent=1 // pred_check_branch
      %20 = sbr.rel (0) target = $region9
    $region8: #{tpu_custom_call.1} parent=1 // pred_region
      %s22 = ssub.s32 128, 128
      %23 = vsyncadd [#allocation8], %s22
      %s25 = sshll.u32 [#allocation7], 4
      %s26 = int_to_ptr.vmem [resolvable:$true] %s25
      %28 = dma.hbm_to_vmem [thread:$0]  %s1, 128, %s26, [#allocation8]
    $region9: #{tpu_custom_call.1} parent=1 // pred_fallthru
      _
    // Predicated region
    $region10: #{tpu_custom_call.1} parent=1 // pred_check
      _
    $region11: #{tpu_custom_call.1} parent=1 // pred_check_branch
      %30 = sbr.rel (0) target = $region13
    $region12: #{tpu_custom_call.1} parent=1 // pred_region
      %31 = dma.done [#allocation6], 128
    $region13: #{tpu_custom_call.1} parent=1 // pred_fallthru
      _
    // Predicated region
    $region14: #{tpu_custom_call.1} parent=1 // pred_check
      _
    $region15: #{tpu_custom_call.1} parent=1 // pred_check_branch
      %33 = sbr.rel (0) target = $region17
    $region16: #{tpu_custom_call.1} parent=1 // pred_region
      %34 = dma.done [#allocation8], 128
    $region17: #{tpu_custom_call.1} parent=1 // pred_fallthru
      _
    %p35 = scmp.eq.s32.totalorder 0, 0
    // Predicated region
    $region18: #{tpu_custom_call.1} parent=1 // pred_check
      %p36 = pneg %p35
    $region19: #{tpu_custom_call.1} parent=1 // pred_check_branch
      %38 = sbr.rel (%p36) target = $region21
    $region20: #{tpu_custom_call.1} parent=1 // pred_region
      %vm39 = vcmask 7168
      %40 = vst.msk [vmem:[#allocation2] sm:$0xff] %vm39, -inf
      %41 = vst.msk [vmem:[#allocation3] sm:$0xff] %vm39, 0.0
      %42 = vst.msk [vmem:[#allocation4] sm:$0xff] %vm39, 0.0
    $region21: #{tpu_custom_call.1} parent=1 // pred_fallthru
      _
    %v43 = vld [vmem:[#allocation5] sm:$0xff]
    %v44 = vld [vmem:[#allocation7] sm:$0xff]
    %v45 = vmul.f32 %v43, 10.0
    %vm46 = vcmask 261120
    %v48 = vsel %vm46, %v45, 0
    %v51 = vsel %vm46, %v44, 0
    %53 = vmatprep.subr.mxu0 0.0
    %54 = vmatpush1.xpose.msra.mxu0 0.0
    %55 = vmatprep.subr.mxu0 0.0
    %56 = vmatpush1.xpose.msra.mxu0 0.0
    %57 = vmatprep.subr.mxu0 0.0
    %58 = vmatpush1.xpose.msra.mxu0 0.0
    %59 = vmatprep.subr.mxu0 0.0
    %60 = vmatpush1.xpose.msra.mxu0 0.0
    %61 = vmatprep.subr.mxu0 0.0
    %62 = vmatpush1.xpose.msra.mxu0 0.0
    %63 = vmatprep.subr.mxu0 0.0
    %64 = vmatpush1.xpose.msra.mxu0 0.0
    %65 = vmatprep.subr.mxu0 0.0
    %66 = vmatpush1.xpose.msra.mxu0 0.0
    %67 = vmatprep.subr.mxu0 0.0
    %68 = vmatpush1.xpose.msra.mxu0 0.0
    %69 = vmatprep.subr.mxu0 0.0
    %70 = vmatpush1.xpose.msra.mxu0 0.0
    %71 = vmatprep.subr.mxu0 0.0
    %72 = vmatpush1.xpose.msra.mxu0 0.0
    %73 = vmatprep.subr.mxu0 0.0
    %74 = vmatpush1.xpose.msra.mxu0 0.0
    %75 = vmatprep.subr.mxu0 0.0
    %76 = vmatpush1.xpose.msra.mxu0 0.0
    %77 = vmatprep.subr.mxu0 0.0
    %78 = vmatpush1.xpose.msra.mxu0 0.0
    %79 = vmatprep.subr.mxu0 0.0
    %80 = vmatpush1.xpose.msra.mxu0 0.0
    %81 = vmatprep.subr.mxu0 0.0
    %82 = vmatpush1.xpose.msra.mxu0 0.0
    %83 = vmatprep.subr.mxu0 0.0
    %84 = vmatpush1.xpose.msra.mxu0 %v51
    %85 = vmatprep.subr.mxu0 0.0
    %86 = vmatpush2.xpose.msra.mxu0 0.0
    %87 = vmatprep.subr.mxu0 0.0
    %88 = vmatpush2.xpose.msra.mxu0 0.0
    %89 = vmatprep.subr.mxu0 0.0
    %90 = vmatpush2.xpose.msra.mxu0 0.0
    %91 = vmatprep.subr.mxu0 0.0
    %92 = vmatpush2.xpose.msra.mxu0 0.0
    %93 = vmatprep.subr.mxu0 0.0
    %94 = vmatpush2.xpose.msra.mxu0 0.0
    %95 = vmatprep.subr.mxu0 0.0
    %96 = vmatpush2.xpose.msra.mxu0 0.0
    %97 = vmatprep.subr.mxu0 0.0
    %98 = vmatpush2.xpose.msra.mxu0 0.0
    %99 = vmatprep.subr.mxu0 0.0
    %100 = vmatpush2.xpose.msra.mxu0 0.0
    %101 = vmatprep.subr.mxu0 0.0
    %102 = vmatpush2.xpose.msra.mxu0 0.0
    %103 = vmatprep.subr.mxu0 0.0
    %104 = vmatpush2.xpose.msra.mxu0 0.0
    %105 = vmatprep.subr.mxu0 0.0
    %106 = vmatpush2.xpose.msra.mxu0 0.0
    %107 = vmatprep.subr.mxu0 0.0
    %108 = vmatpush2.xpose.msra.mxu0 0.0
    %109 = vmatprep.subr.mxu0 0.0
    %110 = vmatpush2.xpose.msra.mxu0 0.0
    %111 = vmatprep.subr.mxu0 0.0
    %112 = vmatpush2.xpose.msra.mxu0 0.0
    %113 = vmatprep.subr.mxu0 0.0
    %114 = vmatpush2.xpose.msra.mxu0 0.0
    %115 = vmatprep.subr.mxu0 0.0
    %116 = vmatpush2.xpose.msra.mxu0 0.0
    %117 = vmatprep.mubr.f32.mxu0 0.0
    %118 = vmatmul.mubr.f32.gmra.mxu0 %v48
    %v119 = vpop.f32.mrf.mxu0
    %v120 = vadd.f32 0.0, %v119
    %v121 = vpop.f32.mrf.mxu0
    %122 = vdwg.mxu0
    %p123 = scmp.eq.s32.totalorder 0, 0
    // Predicated region
    $region22: #{tpu_custom_call.1} parent=1 // pred_check
      %p124 = pneg %p123
    $region23: #{tpu_custom_call.1} parent=1 // pred_check_branch
      %126 = sbr.rel (%p124) target = $region25
    $region24: #{tpu_custom_call.1} parent=1 // pred_region
      %v127 = vmul.f32 %v45, %v44
      %v128 = vsel %vm46, %v127, 0.0
      %129 = vadd.xlane.f32.xlu0 %v128
      %v130 = vpop.xlane.xlu0 %129
      %vm131 = vcmask 7168
      %132 = vst.msk [vmem:[#allocation4] sm:$0xff] %vm131, %v130
    $region25: #{tpu_custom_call.1} parent=1 // pred_fallthru
      _
    %v133 = vld [vmem:[#allocation2] sm:$0xff]
    %vm134 = vcmask 64512
    %v135 = vsel %vm134, %v120, -inf
    %136 = vmax.xlane.f32.xlu0 %v135
    %v137 = vpop.xlane.xlu0 %136
    %v138 = vmax.f32 %v133, %v137
    %v139 = vsub.f32 %v133, %v138
    %v140 = vmul.f32 %v139, 1.442695
    %v141 = vpow.pop %v140
    %v142 = vld [vmem:[#allocation3] sm:$0xff]
    %v143 = vmul.f32 %v141, %v142
    %145 = vset.pattern.permute.xlu0 0
    %146 = vperm.xlu0 %145, %v138
    %v147 = vpop.permute.xlu0 %146
    %v149 = vsub.f32 %v120, %v147
    %v150 = vmul.f32 %v149, 1.442695
    %v151 = vpow.pop %v150
    %v152 = vsel %vm134, %v151, 0.0
    %153 = vadd.xlane.f32.xlu0 %v152
    %v154 = vpop.xlane.xlu0 %153
    %v155 = vadd.f32 %v143, %v154
    %vm156 = vcmask 7168
    %157 = vst.msk [vmem:[#allocation3] sm:$0xff] %vm156, %v155
    %158 = vst.msk [vmem:[#allocation2] sm:$0xff] %vm156, %v138
    // Predicated region
    $region26: #{tpu_custom_call.1} parent=1 // pred_check
      %p159 = pneg %p35
    $region27: #{tpu_custom_call.1} parent=1 // pred_check_branch
      %161 = sbr.rel (%p159) target = $region29
    $region28: #{tpu_custom_call.1} parent=1 // pred_region
      %v162 = vld [vmem:[#allocation2] sm:$0xff]
      %v163 = vld [vmem:[#allocation3] sm:$0xff]
      %v164 = vlog2.pop %v163
      %v165 = vmul.f32 %v164, 0.6931472
      %v166 = vadd.f32 %v162, %v165
      %v167 = vld [vmem:[#allocation4] sm:$0xff]
      %v168 = vsub.f32 %v166, %v167
      %169 = vst.msk [vmem:[%s2] sm:$0xff] %vm156, %v168
    $region29: #{tpu_custom_call.1} parent=1 // pred_fallthru
      _
    // Predicated region
    $region30: #{tpu_custom_call.1} parent=1 // pred_check
      _
    $region31: #{tpu_custom_call.1} parent=1 // pred_check_branch
      %171 = sbr.rel (0) target = $region33
    $region32: #{tpu_custom_call.1} parent=1 // pred_region
      _
    $region33: #{tpu_custom_call.1} parent=1 // pred_fallthru
      _
    // Predicated region
    $region34: #{tpu_custom_call.1} parent=1 // pred_check
      _
    $region35: #{tpu_custom_call.1} parent=1 // pred_check_branch
      %173 = sbr.rel (0) target = $region37
    $region36: #{tpu_custom_call.1} parent=1 // pred_region
      _
    $region37: #{tpu_custom_call.1} parent=1 // pred_fallthru
      _
    %174 = vsyncpa [#allocation6], 1
    %175 = vsyncpa [#allocation8], 1

</llo_original>
